<compile_context>
chip_gen: v7x
topology: tpu7x:2x2x1
jax: 0.10.0
libtpu: 0.0.40
codegen_flags: <defaults>
</compile_context>

<pallas_src>
import math

import jax
import jax.numpy as jnp
from jax import lax
from jax.experimental import pallas as pl
from jax.experimental.pallas import tpu as pltpu


def _pick_tile(n, candidates):
    """Largest candidate that evenly divides n, else n itself."""
    for c in candidates:
        if c <= n and n % c == 0:
            return c
    return n


# ----------------------------------------------------------------------------
# 1x1 conv  ==  (N*H*W, Cin) @ (Cin, Cout) + bias  [+ top-down add, fused]
# Tiled over the flattened spatial dim M so the MXU work pipelines against the
# HBM DMAs and VMEM stays bounded at any resolution.
# ----------------------------------------------------------------------------
def _conv1x1_kernel(x_ref, w_ref, b_ref, o_ref):
    o_ref[...] = (
        jnp.dot(x_ref[...], w_ref[...], preferred_element_type=jnp.float32)
        + b_ref[...]
    ).astype(o_ref.dtype)


def _conv1x1_add_kernel(x_ref, w_ref, b_ref, td_ref, o_ref):
    # lateral 1x1 conv fused with the top-down (already-upsampled) addition.
    o_ref[...] = (
        jnp.dot(x_ref[...], w_ref[...], preferred_element_type=jnp.float32)
        + b_ref[...]
        + td_ref[...].astype(jnp.float32)
    ).astype(o_ref.dtype)


def conv1x1(x_nhwc, w, b, top_down=None):
    """w: (Cout, Cin, 1, 1) torch layout, b: (Cout,).
    top_down: optional (N, H, W, Cout) tensor added to the conv output."""
    N, H, W, Cin = x_nhwc.shape
    Cout = w.shape[0]
    M = N * H * W
    xm = x_nhwc.reshape(M, Cin)
    wm = jnp.transpose(w.reshape(Cout, Cin))          # (Cin, Cout)
    bm = b.reshape(1, Cout)

    TM = _pick_tile(M, (1024, 512, 256, 128, 64, 32, 16, 8))
    grid = (M // TM,)

    in_specs = [
        pl.BlockSpec((TM, Cin), lambda i: (i, 0)),
        pl.BlockSpec((Cin, Cout), lambda i: (0, 0)),
        pl.BlockSpec((1, Cout), lambda i: (0, 0)),
    ]
    args = [xm, wm, bm]
    kernel = _conv1x1_kernel
    if top_down is not None:
        in_specs.append(pl.BlockSpec((TM, Cout), lambda i: (i, 0)))
        args.append(top_down.reshape(M, Cout))
        kernel = _conv1x1_add_kernel

    out = pl.pallas_call(
        kernel,
        out_shape=jax.ShapeDtypeStruct((M, Cout), x_nhwc.dtype),
        grid=grid,
        in_specs=in_specs,
        out_specs=pl.BlockSpec((TM, Cout), lambda i: (i, 0)),
        compiler_params=pltpu.CompilerParams(
            dimension_semantics=("parallel",),
            vmem_limit_bytes=64 * 1024 * 1024,
        ),
    )(*args)
    return out.reshape(N, H, W, Cout)


# ----------------------------------------------------------------------------
# 3x3 conv, stride 1, pad 1  ==  9 shifted matmuls accumulated on the MXU.
# Row-tiled: each grid step computes TH output rows.  The 2 bottom halo rows
# are brought in through two extra single-row BlockSpecs over the same padded
# input, and the TH+2-row working window is assembled in a VMEM scratch.
# The f32 accumulator is a VMEM scratch initialized with the broadcast bias.
# ----------------------------------------------------------------------------
def _conv3x3_kernel(xa_ref, xb1_ref, xb2_ref, w_ref, b_ref, o_ref,
                    xrow_ref, acc_ref):
    # xa : (1, TH, W+2, Cin)  rows [i*TH, i*TH+TH) of the padded input
    # xb1: (1, 1,  W+2, Cin)  padded row i*TH+TH      (bottom halo row 1)
    # xb2: (1, 1,  W+2, Cin)  padded row i*TH+TH+1    (bottom halo row 2)
    # w  : (9, Cin, Cout);  b: (1, Cout);  o: (1, TH, W, Cout)
    TH = xa_ref.shape[1]
    Wp = xa_ref.shape[2]
    Cin = xa_ref.shape[3]
    W = Wp - 2
    Cout = o_ref.shape[3]

    # assemble the (TH+2)-row halo window in VMEM
    xrow_ref[0:TH] = xa_ref[0]
    xrow_ref[TH] = xb1_ref[0, 0]
    xrow_ref[TH + 1] = xb2_ref[0, 0]

    # bias folded into accumulator init (no epilogue add)
    acc_ref[...] = jnp.broadcast_to(b_ref[...], (TH * W, Cout))

    # TODO(synk): stack the 3 dx taps along K ((TH*W, 3*Cin)@(3*Cin, Cout)) to
    # cut MXU pushes 3x once channel counts are 128-aligned; with tiny test
    # channels the lane-concat would just trigger relayout copies.
    for dy in range(3):
        for dx in range(3):
            patch = xrow_ref[dy:dy + TH, dx:dx + W, :]      # (TH, W, Cin)
            acc_ref[...] += jnp.dot(
                patch.reshape(TH * W, Cin),
                w_ref[dy * 3 + dx],
                preferred_element_type=jnp.float32,
            )

    o_ref[0] = acc_ref[...].reshape(TH, W, Cout).astype(o_ref.dtype)


def conv3x3(x_nhwc, w, b):
    """w: (Cout, Cin, 3, 3) torch layout, b: (Cout,). stride=1, padding=1."""
    N, H, W, Cin = x_nhwc.shape
    Cout = w.shape[0]
    # TODO(synk): halo padding is materialized with jnp.pad in XLA (one extra
    # HBM pass per level); in-kernel border masking would remove it.
    xp = jnp.pad(x_nhwc, ((0, 0), (1, 1), (1, 1), (0, 0)))
    wk = jnp.transpose(w, (2, 3, 1, 0)).reshape(9, Cin, Cout)   # (kh*kw, Cin, Cout)
    bm = b.reshape(1, Cout)

    TH = _pick_tile(H, (32, 16, 8, 4, 2, 1))
    Wp = W + 2
    grid = (N, H // TH)

    out = pl.pallas_call(
        _conv3x3_kernel,
        out_shape=jax.ShapeDtypeStruct((N, H, W, Cout), x_nhwc.dtype),
        grid=grid,
        in_specs=[
            pl.BlockSpec((1, TH, Wp, Cin), lambda n, i: (n, i, 0, 0)),
            pl.BlockSpec((1, 1, Wp, Cin), lambda n, i: (n, (i + 1) * TH, 0, 0)),
            pl.BlockSpec((1, 1, Wp, Cin), lambda n, i: (n, (i + 1) * TH + 1, 0, 0)),
            pl.BlockSpec((9, Cin, Cout), lambda n, i: (0, 0, 0)),
            pl.BlockSpec((1, Cout), lambda n, i: (0, 0)),
        ],
        out_specs=pl.BlockSpec((1, TH, W, Cout), lambda n, i: (n, i, 0, 0)),
        scratch_shapes=[
            pltpu.VMEM((TH + 2, Wp, Cin), x_nhwc.dtype),
            pltpu.VMEM((TH * W, Cout), jnp.float32),
        ],
        compiler_params=pltpu.CompilerParams(
            dimension_semantics=("parallel", "parallel"),
            vmem_limit_bytes=64 * 1024 * 1024,
        ),
    )(xp, xp, xp, wk, bm)
    return out


# ----------------------------------------------------------------------------
# Top-down path helpers (pure XLA glue, no extra Pallas kernels / transposes)
# ----------------------------------------------------------------------------
def nearest_resize(x_nhwc, H, W):
    """PyTorch F.interpolate(mode='nearest') to size (H, W)."""
    # TODO(synk): a fully in-kernel 2x interleave (sublane interleave) would
    # remove this one XLA gather pass; the add itself is fused into conv1x1.
    N, h, w, C = x_nhwc.shape
    if (H, W) == (h, w):
        return x_nhwc
    iy = (jnp.arange(H) * h) // H
    ix = (jnp.arange(W) * w) // W
    return x_nhwc[:, iy][:, :, ix]


def maxpool_k1_s2(x_nhwc):
    """F.max_pool2d(x, 1, 2, 0) == pure subsample -> strided slice (no kernel)."""
    return x_nhwc[:, ::2, ::2, :]


# ----------------------------------------------------------------------------
# FPN module (parameters initialized deterministically in-script)
# ----------------------------------------------------------------------------
def _kaiming_uniform(key, shape, a=1.0):
    # shape = (Cout, Cin, kh, kw); matches nn.init.kaiming_uniform_(w, a=1)
    fan_in = shape[1] * shape[2] * shape[3]
    gain = math.sqrt(2.0 / (1.0 + a * a))
    bound = math.sqrt(3.0) * gain / math.sqrt(fan_in)
    return jax.random.uniform(key, shape, jnp.float32, -bound, bound)


class FPNPallas:
    def __init__(self, in_channels_list, out_channels, key):
        self.params = []
        for cin in in_channels_list:
            if cin == 0:
                self.params.append(None)
                continue
            key, k1, k2 = jax.random.split(key, 3)
            inner_w = _kaiming_uniform(k1, (out_channels, cin, 1, 1))
            inner_b = jnp.zeros((out_channels,), jnp.float32)
            layer_w = _kaiming_uniform(k2, (out_channels, out_channels, 3, 3))
            layer_b = jnp.zeros((out_channels,), jnp.float32)
            self.params.append((inner_w, inner_b, layer_w, layer_b))

    def __call__(self, xs_nchw):
        # TODO(synk): bf16 activations/weights with f32 MXU accumulation would
        # halve HBM traffic; kept f32 here to match the f32 reference tolerance.
        xs = [jnp.transpose(x, (0, 2, 3, 1)) for x in xs_nchw]   # NCHW -> NHWC
        iw, ib, lw, lb = self.params[-1]
        last_inner = conv1x1(xs[-1], iw, ib)
        results = [conv3x3(last_inner, lw, lb)]
        for x, p in zip(xs[:-1][::-1], self.params[:-1][::-1]):
            if p is None:
                continue
            iw, ib, lw, lb = p
            top_down = nearest_resize(last_inner, x.shape[1], x.shape[2])
            last_inner = conv1x1(x, iw, ib, top_down=top_down)   # fused lateral+add
            results.insert(0, conv3x3(last_inner, lw, lb))
        # top_blocks = LastLevelMaxPool
        results.append(maxpool_k1_s2(results[-1]))
        # NHWC -> NCHW to match PyTorch output convention
        return tuple(jnp.transpose(r, (0, 3, 1, 2)) for r in results)


# ----------------------------------------------------------------------------
# Pure-JAX reference (lax.conv) used to verify the Pallas kernels
# ----------------------------------------------------------------------------
def ref_forward(xs_nchw, params):
    def conv(x, w, b, pad):
        y = lax.conv_general_dilated(
            x, w, (1, 1), [(pad, pad), (pad, pad)],
            dimension_numbers=("NCHW", "OIHW", "NCHW"))
        return y + b[None, :, None, None]

    iw, ib, lw, lb = params[-1]
    last_inner = conv(xs_nchw[-1], iw, ib, 0)
    results = [conv(last_inner, lw, lb, 1)]
    for x, p in zip(xs_nchw[:-1][::-1], params[:-1][::-1]):
        iw, ib, lw, lb = p
        lateral = conv(x, iw, ib, 0)
        up = jnp.repeat(jnp.repeat(last_inner, 2, axis=2), 2, axis=3)
        last_inner = lateral + up
        results.insert(0, conv(last_inner, lw, lb, 1))
    results.append(results[-1][:, :, ::2, ::2])
    return tuple(results)


if __name__ == "__main__":
    key = jax.random.PRNGKey(0)
    kx, kp = jax.random.split(key)

    in_channels_list = [4, 8, 16]
    out_channels = 8
    shapes = [(2, 4, 32, 32), (2, 8, 16, 16), (2, 16, 8, 8)]   # C3, C4, C5
    xkeys = jax.random.split(kx, len(shapes))
    xs = [jax.random.normal(k, s, jnp.float32) for k, s in zip(xkeys, shapes)]

    fpn = FPNPallas(in_channels_list, out_channels, kp)
    outs = jax.block_until_ready(fpn(xs))

    refs = ref_forward(xs, fpn.params)
    assert len(outs) == len(refs)
    for o, r in zip(outs, refs):
        assert o.shape == r.shape, (o.shape, r.shape)
        assert jnp.allclose(o, r, atol=1e-4, rtol=1e-4), float(jnp.max(jnp.abs(o - r)))

    print("KERNEL_OK")
</pallas_src>

<mosaic_0001>
module attributes {stable_mosaic.version = 11 : i64} {
  func.func @_conv1x1_kernel(%arg0: i32, %arg1: memref<128x16xf32, #tpu.memory_space<vmem>>, %arg2: memref<16x8xf32, #tpu.memory_space<vmem>>, %arg3: memref<1x8xf32, #tpu.memory_space<vmem>>, %arg4: memref<128x8xf32, #tpu.memory_space<vmem>>) attributes {dimension_semantics = [#tpu.dimension_semantics<parallel>], iteration_bounds = array<i64: 1>, scalar_prefetch = 0 : i64, scratch_operands = 0 : i64, tpu.core_type = #tpu.core_type<tc>, window_params = [{transform_indices = @transform_0, window_bounds = array<i64: 128, 16>}, {pipeline_mode = #tpu.pipeline_mode<synchronous>, transform_indices = @transform_1, window_bounds = array<i64: 16, 8>}, {pipeline_mode = #tpu.pipeline_mode<synchronous>, transform_indices = @transform_2, window_bounds = array<i64: 1, 8>}, {transform_indices = @transform_3, window_bounds = array<i64: 128, 8>}]} {
    %c0 = arith.constant 0 : index
    %c0_0 = arith.constant 0 : index
    %0 = vector.load %arg1[%c0, %c0_0] : memref<128x16xf32, #tpu.memory_space<vmem>>, vector<128x16xf32>
    %c0_1 = arith.constant 0 : index
    %c0_2 = arith.constant 0 : index
    %1 = vector.load %arg2[%c0_1, %c0_2] : memref<16x8xf32, #tpu.memory_space<vmem>>, vector<16x8xf32>
    %cst = arith.constant dense<0.000000e+00> : vector<128x8xf32>
    %2 = tpu.matmul %0, %1, %cst {dimension_numbers = #tpu.dot_dimension_numbers<[1], [0], [0], [1], [0, 0, 1, 1], [], []>} : vector<128x16xf32>, vector<16x8xf32>, vector<128x8xf32> -> vector<128x8xf32>
    %c0_3 = arith.constant 0 : index
    %c0_4 = arith.constant 0 : index
    %3 = vector.load %arg3[%c0_3, %c0_4] : memref<1x8xf32, #tpu.memory_space<vmem>>, vector<1x8xf32>
    %4 = vector.broadcast %3 : vector<1x8xf32> to vector<128x8xf32>
    %5 = arith.addf %2, %4 : vector<128x8xf32>
    %c0_5 = arith.constant 0 : index
    %c0_6 = arith.constant 0 : index
    %6 = vector.load %arg4[%c0_5, %c0_6] : memref<128x8xf32, #tpu.memory_space<vmem>>, vector<128x8xf32>
    tpu.vector_store %arg4[%c0_5, %c0_6], %5 {strides = array<i32>} : memref<128x8xf32, #tpu.memory_space<vmem>>, vector<128x8xf32>,
    return
  }
  func.func @transform_0(%arg0: i32) -> (i32, i32) {
    %c0_i32 = arith.constant 0 : i32
    %c0_i32_0 = arith.constant 0 : i32
    return %arg0, %c0_i32 : i32, i32
  }
  func.func @transform_1(%arg0: i32) -> (i32, i32) {
    %c0_i32 = arith.constant 0 : i32
    %c0_i32_0 = arith.constant 0 : i32
    %c0_i32_1 = arith.constant 0 : i32
    return %c0_i32, %c0_i32_0 : i32, i32
  }
  func.func @transform_2(%arg0: i32) -> (i32, i32) {
    %c0_i32 = arith.constant 0 : i32
    %c0_i32_0 = arith.constant 0 : i32
    %c0_i32_1 = arith.constant 0 : i32
    return %c0_i32, %c0_i32_0 : i32, i32
  }
  func.func @transform_3(%arg0: i32) -> (i32, i32) {
    %c0_i32 = arith.constant 0 : i32
    %c0_i32_0 = arith.constant 0 : i32
    return %arg0, %c0_i32 : i32, i32
  }
}

</mosaic_0001>

<llo_original>
// kernel: tpu_custom_call.1
$region0: #{tpu_custom_call.1}
  #allocation0 [shape = 'u32[]', space=smem, size = 0x4, offset = 0x4, fixed_abs, tag = 'smem constant byte address 0x4 - core index']
  #allocation1 [shape = 'u32[144,128]{1,0:T(1,128)}', space=vmem, size = 0x12000, scoped, tag = 'internal scratch']
  %s0 = inlined_call_operand.hbm [shape: f32[128,16], index: 0, kind: input, shape index: {}]
  %s1 = inlined_call_operand.hbm [shape: f32[16,8], index: 1, kind: input, shape index: {}]
  %s2 = inlined_call_operand.hbm [shape: f32[1,8], index: 2, kind: input, shape index: {}]
  %s3 = inlined_call_operand.hbm [shape: f32[128,8], index: 3, kind: output, shape index: {}]
  %s4 = sld [smem:[#allocation0]]
  $region34: #{tpu_custom_call.1} parent=0
    _
  %s6 = ssub.s32 1, %s4
  %s7 = scalar_select 0, %s6, %s4
  $region1: #{tpu_custom_call.1} parent=0
    #allocation2 [shape = 'u8[65536]{0}', space=vmem, size = 0x10000, scoped, tag = 'input window, operand 0, single buffered']
    #allocation3 [shape = 's32[1]{0}', space=sflag, size = 0x4, scoped, tag = 'scoped memory for tpu_custom_call.1']
    #allocation4 [shape = 's32[1]{0}', space=sflag, size = 0x4, scoped, tag = 'scoped memory for tpu_custom_call.1']
    #allocation5 [shape = 'u8[8192]{0}', space=vmem, size = 0x2000, scoped, tag = 'input window, operand 1, single buffered']
    #allocation6 [shape = 's32[1]{0}', space=sflag, size = 0x4, scoped, tag = 'scoped memory for tpu_custom_call.1']
    #allocation7 [shape = 'u8[512]{0}', space=vmem, size = 0x400, scoped, tag = 'input window, operand 2, single buffered']
    #allocation8 [shape = 'u8[65536]{0}', space=vmem, size = 0x10000, scoped, tag = 'output window, operand 0, single buffered']
    %8 = vsyncpa [#allocation3], 0
    %9 = vsyncpa [#allocation6], 0
    %10 = vsyncpa [#allocation4], 0
    // Predicated region
    $region2: #{tpu_custom_call.1} parent=1 // pred_check
      _
    $region3: #{tpu_custom_call.1} parent=1 // pred_check_branch
      %12 = sbr.rel (0) target = $region5
    $region4: #{tpu_custom_call.1} parent=1 // pred_region
      %s14 = ssub.s32 2048, 2048
      %15 = vsyncadd [#allocation3], %s14
      %s16 = sshll.u32 [#allocation2], 4
      %s17 = int_to_ptr.vmem [resolvable:$true] %s16
      %22 = dma.hbm_to_vmem [thread:$0]  %s0, 2048, %s17, [#allocation3], 128, 128, 8
    $region5: #{tpu_custom_call.1} parent=1 // pred_fallthru
      _
    // Predicated region
    $region6: #{tpu_custom_call.1} parent=1 // pred_check
      _
    $region7: #{tpu_custom_call.1} parent=1 // pred_check_branch
      %24 = sbr.rel (0) target = $region9
    $region8: #{tpu_custom_call.1} parent=1 // pred_region
      %s26 = ssub.s32 256, 256
      %27 = vsyncadd [#allocation6], %s26
      %s28 = sshll.u32 [#allocation5], 4
      %s29 = int_to_ptr.vmem [resolvable:$true] %s28
      %34 = dma.hbm_to_vmem [thread:$0]  %s1, 256, %s29, [#allocation6], 128, 128, 8
    $region9: #{tpu_custom_call.1} parent=1 // pred_fallthru
      _
    // Predicated region
    $region10: #{tpu_custom_call.1} parent=1 // pred_check
      _
    $region11: #{tpu_custom_call.1} parent=1 // pred_check_branch
      %36 = sbr.rel (0) target = $region13
    $region12: #{tpu_custom_call.1} parent=1 // pred_region
      %s38 = ssub.s32 16, 16
      %39 = vsyncadd [#allocation6], %s38
      %s41 = sshll.u32 [#allocation7], 4
      %s42 = int_to_ptr.vmem [resolvable:$true] %s41
      %44 = dma.hbm_to_vmem [thread:$0]  %s2, 16, %s42, [#allocation6]
    $region13: #{tpu_custom_call.1} parent=1 // pred_fallthru
      _
    // Predicated region
    $region14: #{tpu_custom_call.1} parent=1 // pred_check
      _
    $region15: #{tpu_custom_call.1} parent=1 // pred_check_branch
      %46 = sbr.rel (0) target = $region17
    $region16: #{tpu_custom_call.1} parent=1 // pred_region
      %47 = dma.done [#allocation3], 2048
    $region17: #{tpu_custom_call.1} parent=1 // pred_fallthru
      _
    // Predicated region
    $region18: #{tpu_custom_call.1} parent=1 // pred_check
      _
    $region19: #{tpu_custom_call.1} parent=1 // pred_check_branch
      %49 = sbr.rel (0) target = $region21
    $region20: #{tpu_custom_call.1} parent=1 // pred_region
      %50 = dma.done [#allocation6], 256
    $region21: #{tpu_custom_call.1} parent=1 // pred_fallthru
      _
    // Predicated region
    $region22: #{tpu_custom_call.1} parent=1 // pred_check
      _
    $region23: #{tpu_custom_call.1} parent=1 // pred_check_branch
      %52 = sbr.rel (0) target = $region25
    $region24: #{tpu_custom_call.1} parent=1 // pred_region
      %53 = dma.done [#allocation6], 16
    $region25: #{tpu_custom_call.1} parent=1 // pred_fallthru
      _
    %v54 = vld [vmem:[#allocation2] sm:$0xff]
    %v55 = vld [vmem:[#allocation2 + $0x8] sm:$0xff]
    %v56 = vld [vmem:[#allocation2 + $0x10] sm:$0xff]
    %v57 = vld [vmem:[#allocation2 + $0x18] sm:$0xff]
    %v58 = vld [vmem:[#allocation2 + $0x20] sm:$0xff]
    %v59 = vld [vmem:[#allocation2 + $0x28] sm:$0xff]
    %v60 = vld [vmem:[#allocation2 + $0x30] sm:$0xff]
    %v61 = vld [vmem:[#allocation2 + $0x38] sm:$0xff]
    %v62 = vld [vmem:[#allocation2 + $0x40] sm:$0xff]
    %v63 = vld [vmem:[#allocation2 + $0x48] sm:$0xff]
    %v64 = vld [vmem:[#allocation2 + $0x50] sm:$0xff]
    %v65 = vld [vmem:[#allocation2 + $0x58] sm:$0xff]
    %v66 = vld [vmem:[#allocation2 + $0x60] sm:$0xff]
    %v67 = vld [vmem:[#allocation2 + $0x68] sm:$0xff]
    %v68 = vld [vmem:[#allocation2 + $0x70] sm:$0xff]
    %v69 = vld [vmem:[#allocation2 + $0x78] sm:$0xff]
    %v70 = vld [vmem:[#allocation5] sm:$0xff]
    %v71 = vld [vmem:[#allocation5 + $0x8] sm:$0xff]
    %v72 = vld [vmem:[#allocation7] sm:$0x1]
    %v74 = vlaneseq
    %v75 = vshrl.u32 %v74, 7
    %v76 = vsub.s32 0, %v75
    %v77 = vrot.slane %v72, %v76
    %vm79 = vcmask 130048
    %v81 = vsel %vm79, %v54, 0
    %v84 = vsel %vm79, %v55, 0
    %v87 = vsel %vm79, %v56, 0
    %v90 = vsel %vm79, %v57, 0
    %v93 = vsel %vm79, %v58, 0
    %v96 = vsel %vm79, %v59, 0
    %v99 = vsel %vm79, %v60, 0
    %v102 = vsel %vm79, %v61, 0
    %v105 = vsel %vm79, %v62, 0
    %v108 = vsel %vm79, %v63, 0
    %v111 = vsel %vm79, %v64, 0
    %v114 = vsel %vm79, %v65, 0
    %v117 = vsel %vm79, %v66, 0
    %v120 = vsel %vm79, %v67, 0
    %v123 = vsel %vm79, %v68, 0
    %v126 = vsel %vm79, %v69, 0
    %128 = vmatprep.subr.mxu0 0.0
    %129 = vmatpush1.msra.mxu0 %v70
    %130 = vmatprep.subr.mxu0 0.0
    %131 = vmatpush1.msra.mxu0 %v71
    %132 = vmatprep.subr.mxu0 0.0
    %133 = vmatpush1.msra.mxu0 0.0
    %134 = vmatprep.subr.mxu0 0.0
    %135 = vmatpush1.msra.mxu0 0.0
    %136 = vmatprep.subr.mxu0 0.0
    %137 = vmatpush1.msra.mxu0 0.0
    %138 = vmatprep.subr.mxu0 0.0
    %139 = vmatpush1.msra.mxu0 0.0
    %140 = vmatprep.subr.mxu0 0.0
    %141 = vmatpush1.msra.mxu0 0.0
    %142 = vmatprep.subr.mxu0 0.0
    %143 = vmatpush1.msra.mxu0 0.0
    %144 = vmatprep.subr.mxu0 0.0
    %145 = vmatpush1.msra.mxu0 0.0
    %146 = vmatprep.subr.mxu0 0.0
    %147 = vmatpush1.msra.mxu0 0.0
    %148 = vmatprep.subr.mxu0 0.0
    %149 = vmatpush1.msra.mxu0 0.0
    %150 = vmatprep.subr.mxu0 0.0
    %151 = vmatpush1.msra.mxu0 0.0
    %152 = vmatprep.subr.mxu0 0.0
    %153 = vmatpush1.msra.mxu0 0.0
    %154 = vmatprep.subr.mxu0 0.0
    %155 = vmatpush1.msra.mxu0 0.0
    %156 = vmatprep.subr.mxu0 0.0
    %157 = vmatpush1.msra.mxu0 0.0
    %158 = vmatprep.subr.mxu0 0.0
    %159 = vmatpush1.msra.mxu0 0.0
    %160 = vmatprep.subr.mxu0 0.0
    %161 = vmatpush1.msra.mxu0 0.0
    %162 = vmatprep.subr.mxu0 0.0
    %163 = vmatpush1.msra.mxu0 0.0
    %164 = vmatprep.subr.mxu0 0.0
    %165 = vmatpush1.msra.mxu0 0.0
    %166 = vmatprep.subr.mxu0 0.0
    %167 = vmatpush1.msra.mxu0 0.0
    %168 = vmatprep.subr.mxu0 0.0
    %169 = vmatpush1.msra.mxu0 0.0
    %170 = vmatprep.subr.mxu0 0.0
    %171 = vmatpush1.msra.mxu0 0.0
    %172 = vmatprep.subr.mxu0 0.0
    %173 = vmatpush1.msra.mxu0 0.0
    %174 = vmatprep.subr.mxu0 0.0
    %175 = vmatpush1.msra.mxu0 0.0
    %176 = vmatprep.subr.mxu0 0.0
    %177 = vmatpush1.msra.mxu0 0.0
    %178 = vmatprep.subr.mxu0 0.0
    %179 = vmatpush1.msra.mxu0 0.0
    %180 = vmatprep.subr.mxu0 0.0
    %181 = vmatpush1.msra.mxu0 0.0
    %182 = vmatprep.subr.mxu0 0.0
    %183 = vmatpush1.msra.mxu0 0.0
    %184 = vmatprep.subr.mxu0 0.0
    %185 = vmatpush1.msra.mxu0 0.0
    %186 = vmatprep.subr.mxu0 0.0
    %187 = vmatpush1.msra.mxu0 0.0
    %188 = vmatprep.subr.mxu0 0.0
    %189 = vmatpush1.msra.mxu0 0.0
    %190 = vmatprep.subr.mxu0 0.0
    %191 = vmatpush1.msra.mxu0 0.0
    %192 = vmatprep.mubr.f32.mxu0 0.0
    %193 = vmatmul.mubr.f32.gmra.mrb[0].mxu0 %v81
    %v194 = vpop.f32.mrb[0].mxu0
    %v195 = vadd.f32 %v77, %v194
    %v196 = vpop.f32.mrb[0].mxu0
    %197 = vmatprep.mubr.f32.mxu0 0.0
    %198 = vmatmul.mubr.f32.gmra.mrb[0].mxu0 %v84
    %v199 = vpop.f32.mrb[0].mxu0
    %v200 = vadd.f32 %v77, %v199
    %v201 = vpop.f32.mrb[0].mxu0
    %202 = vmatprep.mubr.f32.mxu0 0.0
    %203 = vmatmul.mubr.f32.gmra.mrb[0].mxu0 %v87
    %v204 = vpop.f32.mrb[0].mxu0
    %v205 = vadd.f32 %v77, %v204
    %v206 = vpop.f32.mrb[0].mxu0
    %207 = vmatprep.mubr.f32.mxu0 0.0
    %208 = vmatmul.mubr.f32.gmra.mrb[0].mxu0 %v90
    %v209 = vpop.f32.mrb[0].mxu0
    %v210 = vadd.f32 %v77, %v209
    %v211 = vpop.f32.mrb[0].mxu0
    %212 = vmatprep.mubr.f32.mxu0 0.0
    %213 = vmatmul.mubr.f32.gmra.mrb[0].mxu0 %v93
    %v214 = vpop.f32.mrb[0].mxu0
    %v215 = vadd.f32 %v77, %v214
    %v216 = vpop.f32.mrb[0].mxu0
    %217 = vmatprep.mubr.f32.mxu0 0.0
    %218 = vmatmul.mubr.f32.gmra.mrb[0].mxu0 %v96
    %v219 = vpop.f32.mrb[0].mxu0
    %v220 = vadd.f32 %v77, %v219
    %v221 = vpop.f32.mrb[0].mxu0
    %222 = vmatprep.mubr.f32.mxu0 0.0
    %223 = vmatmul.mubr.f32.gmra.mrb[0].mxu0 %v99
    %v224 = vpop.f32.mrb[0].mxu0
    %v225 = vadd.f32 %v77, %v224
    %v226 = vpop.f32.mrb[0].mxu0
    %227 = vmatprep.mubr.f32.mxu0 0.0
    %228 = vmatmul.mubr.f32.gmra.mrb[0].mxu0 %v102
    %v229 = vpop.f32.mrb[0].mxu0
    %v230 = vadd.f32 %v77, %v229
    %v231 = vpop.f32.mrb[0].mxu0
    %232 = vmatprep.mubr.f32.mxu0 0.0
    %233 = vmatmul.mubr.f32.gmra.mrb[0].mxu0 %v105
    %v234 = vpop.f32.mrb[0].mxu0
    %v235 = vadd.f32 %v77, %v234
    %v236 = vpop.f32.mrb[0].mxu0
    %237 = vmatprep.mubr.f32.mxu0 0.0
    %238 = vmatmul.mubr.f32.gmra.mrb[0].mxu0 %v108
    %v239 = vpop.f32.mrb[0].mxu0
    %v240 = vadd.f32 %v77, %v239
    %v241 = vpop.f32.mrb[0].mxu0
    %242 = vmatprep.mubr.f32.mxu0 0.0
    %243 = vmatmul.mubr.f32.gmra.mrb[0].mxu0 %v111
    %v244 = vpop.f32.mrb[0].mxu0
    %v245 = vadd.f32 %v77, %v244
    %v246 = vpop.f32.mrb[0].mxu0
    %247 = vmatprep.mubr.f32.mxu0 0.0
    %248 = vmatmul.mubr.f32.gmra.mrb[0].mxu0 %v114
    %v249 = vpop.f32.mrb[0].mxu0
    %v250 = vadd.f32 %v77, %v249
    %v251 = vpop.f32.mrb[0].mxu0
    %252 = vmatprep.mubr.f32.mxu0 0.0
    %253 = vmatmul.mubr.f32.gmra.mrb[0].mxu0 %v117
    %v254 = vpop.f32.mrb[0].mxu0
    %v255 = vadd.f32 %v77, %v254
    %v256 = vpop.f32.mrb[0].mxu0
    %257 = vmatprep.mubr.f32.mxu0 0.0
    %258 = vmatmul.mubr.f32.gmra.mrb[0].mxu0 %v120
    %v259 = vpop.f32.mrb[0].mxu0
    %v260 = vadd.f32 %v77, %v259
    %v261 = vpop.f32.mrb[0].mxu0
    %262 = vmatprep.mubr.f32.mxu0 0.0
    %263 = vmatmul.mubr.f32.gmra.mrb[0].mxu0 %v123
    %v264 = vpop.f32.mrb[0].mxu0
    %v265 = vadd.f32 %v77, %v264
    %v266 = vpop.f32.mrb[0].mxu0
    %267 = vmatprep.mubr.f32.mxu0 0.0
    %268 = vmatmul.mubr.f32.gmra.mrb[0].mxu0 %v126
    %v269 = vpop.f32.mrb[0].mxu0
    %v270 = vadd.f32 %v77, %v269
    %v271 = vpop.f32.mrb[0].mxu0
    %272 = vdwg.mxu0
    %vm273 = vcmask 64512
    %274 = vst.msk [vmem:[#allocation8] sm:$0xff] %vm273, %v195
    %275 = vst.msk [vmem:[#allocation8 + $0x8] sm:$0xff] %vm273, %v200
    %276 = vst.msk [vmem:[#allocation8 + $0x10] sm:$0xff] %vm273, %v205
    %277 = vst.msk [vmem:[#allocation8 + $0x18] sm:$0xff] %vm273, %v210
    %278 = vst.msk [vmem:[#allocation8 + $0x20] sm:$0xff] %vm273, %v215
    %279 = vst.msk [vmem:[#allocation8 + $0x28] sm:$0xff] %vm273, %v220
    %280 = vst.msk [vmem:[#allocation8 + $0x30] sm:$0xff] %vm273, %v225
    %281 = vst.msk [vmem:[#allocation8 + $0x38] sm:$0xff] %vm273, %v230
    %282 = vst.msk [vmem:[#allocation8 + $0x40] sm:$0xff] %vm273, %v235
    %283 = vst.msk [vmem:[#allocation8 + $0x48] sm:$0xff] %vm273, %v240
    %284 = vst.msk [vmem:[#allocation8 + $0x50] sm:$0xff] %vm273, %v245
    %285 = vst.msk [vmem:[#allocation8 + $0x58] sm:$0xff] %vm273, %v250
    %286 = vst.msk [vmem:[#allocation8 + $0x60] sm:$0xff] %vm273, %v255
    %287 = vst.msk [vmem:[#allocation8 + $0x68] sm:$0xff] %vm273, %v260
    %288 = vst.msk [vmem:[#allocation8 + $0x70] sm:$0xff] %vm273, %v265
    %289 = vst.msk [vmem:[#allocation8 + $0x78] sm:$0xff] %vm273, %v270
    // Predicated region
    $region26: #{tpu_custom_call.1} parent=1 // pred_check
      _
    $region27: #{tpu_custom_call.1} parent=1 // pred_check_branch
      %291 = sbr.rel (0) target = $region29
    $region28: #{tpu_custom_call.1} parent=1 // pred_region
      %s293 = ssub.s32 2048, 2048
      %294 = vsyncadd [#allocation4], %s293
      %s295 = sshll.u32 [#allocation8], 4
      %s296 = int_to_ptr.vmem [resolvable:$true] %s295
      %301 = dma.vmem_to_hbm [thread:$0]  %s296, 2048, %s3, [#allocation4], 128, 128, 8
    $region29: #{tpu_custom_call.1} parent=1 // pred_fallthru
      _
    // Predicated region
    $region30: #{tpu_custom_call.1} parent=1 // pred_check
      _
    $region31: #{tpu_custom_call.1} parent=1 // pred_check_branch
      %303 = sbr.rel (0) target = $region33
    $region32: #{tpu_custom_call.1} parent=1 // pred_region
      %304 = dma.done [#allocation4], 2048
    $region33: #{tpu_custom_call.1} parent=1 // pred_fallthru
      _
    %305 = vsyncpa [#allocation3], 1
    %306 = vsyncpa [#allocation6], 1
    %307 = vsyncpa [#allocation4], 1

</llo_original>
